<compile_context>
chip_gen: v6e
topology: v6e:2x2x1
jax: 0.10.0
libtpu: 0.0.40
codegen_flags: <defaults>
</compile_context>

<pallas_src>
import functools

import jax
import jax.numpy as jnp
from jax import lax
from jax.experimental import pallas as pl
from jax.experimental.pallas import tpu as pltpu


def _round_up(x, m):
    return -(-x // m) * m


def _weighted_loss_kernel(w_ref, e_ref, g_ref, out_ref, *, tb, d_block, b_total):
    step = pl.program_id(0)

    e = e_ref[...].astype(jnp.float32)
    g = g_ref[...].astype(jnp.float32)
    diff = e - g
    sq = diff * diff

    # (1, d_block) weight row, resident in VMEM (constant block index).
    w = w_ref[...]

    # Mask (select, not *0) so garbage in unweighted lanes (>=58) or in the
    # unread rows of a partial last tile can never poison the sum with NaN.
    rows = lax.broadcasted_iota(jnp.int32, sq.shape, 0)
    rows_left = b_total - step * tb                      # scalar
    valid = (rows < rows_left) & (w != jnp.float32(0.0))
    contrib = jnp.where(valid, sq * w, jnp.float32(0.0))

    # Fold tb rows onto 8 sublanes with pure vreg adds; the final tiny
    # reduction over (num_tiles*8, d_block) happens in the wrapper.
    out_ref[...] = jnp.sum(contrib.reshape(tb // 8, 8, d_block), axis=0)


def weighted_loss(embedding, embedding_gt, *, pose=1.0, betas=10.0,
                  small_input_xla_fallback=False):
    B, D = embedding.shape
    assert embedding_gt.shape == (B, D)
    assert D >= 58, "WeightedLoss slices [:, 0:48] and [:, 48:58]"

    # For tiny inputs the fixed pallas_call launch overhead dominates; allow
    # callers to opt into plain XLA there (off by default so tests exercise
    # the kernel path).
    if small_input_xla_fallback and 2 * B * D * embedding.dtype.itemsize < (1 << 20):
        return weighted_loss_reference(embedding, embedding_gt, pose, betas)

    # Lane block: only lanes [0, 58) carry weight.  If D > 128, read just the
    # first 128-lane block (legal width, contains all weighted lanes).
    d_block = D if D <= 128 else 128

    # Batch tile: big tiles amortize per-grid-step overhead; (B+1)//2 gives
    # >=2 grid steps for mid/large B so DMA overlaps compute; 8192 caps the
    # double-buffered VMEM footprint at ~16 MiB.
    tb = min(8192, max(8, _round_up((B + 1) // 2, 8)))
    num_tiles = pl.cdiv(B, tb)

    # Per-lane weights folding both mean normalizations and the 1.0/10.0 term
    # weights into one multiply: pose/(B*48) for lanes [0,48), betas/(B*10)
    # for [48,58), 0 elsewhere.
    col = jnp.arange(d_block, dtype=jnp.int32)
    w_row = jnp.where(
        col < 48, jnp.float32(pose) / jnp.float32(B * 48),
        jnp.where(col < 58, jnp.float32(betas) / jnp.float32(B * 10),
                  jnp.float32(0.0))).reshape(1, d_block).astype(jnp.float32)

    kernel = functools.partial(
        _weighted_loss_kernel, tb=tb, d_block=d_block, b_total=B)

    partials = pl.pallas_call(
        kernel,
        out_shape=jax.ShapeDtypeStruct((num_tiles * 8, d_block), jnp.float32),
        grid_spec=pltpu.PrefetchScalarGridSpec(
            num_scalar_prefetch=0,
            grid=(num_tiles,),
            in_specs=[
                pl.BlockSpec((1, d_block), lambda i: (0, 0)),   # weight row
                pl.BlockSpec((tb, d_block), lambda i: (i, 0)),  # embedding
                pl.BlockSpec((tb, d_block), lambda i: (i, 0)),  # embedding_gt
            ],
            out_specs=pl.BlockSpec((8, d_block), lambda i: (i, 0)),
        ),
        compiler_params=pltpu.CompilerParams(
            dimension_semantics=("parallel",),
            vmem_limit_bytes=32 * 1024 * 1024,
        ),
    )(w_row, embedding, embedding_gt)

    # Tiny final reduction of per-tile partial sums (done by XLA).
    return jnp.sum(partials)


def weighted_loss_reference(embedding, embedding_gt, pose=1.0, betas=10.0):
    """Pure-JAX replica of the PyTorch forward (for verification)."""
    loss_pose = jnp.mean((embedding[:, 0:48] - embedding_gt[:, 0:48]) ** 2)
    loss_betas = jnp.mean((embedding[:, 48:58] - embedding_gt[:, 48:58]) ** 2)
    return pose * loss_pose + betas * loss_betas


if __name__ == "__main__":
    key = jax.random.PRNGKey(0)
    ke, kg = jax.random.split(key, 2)

    B, D = 2, 58  # small test shapes; the forward requires D >= 58

    embedding = jax.random.normal(ke, (B, D), dtype=jnp.float32)
    embedding_gt = jax.random.normal(kg, (B, D), dtype=jnp.float32)

    loss = jax.block_until_ready(weighted_loss(embedding, embedding_gt))
    ref = jax.block_until_ready(weighted_loss_reference(embedding, embedding_gt))

    assert jnp.allclose(loss, ref, rtol=1e-5, atol=1e-6), (loss, ref)
    print("KERNEL_OK")
</pallas_src>

<mosaic_0001>
module attributes {stable_mosaic.version = 11 : i64} {
  func.func @_weighted_loss_kernel(%arg0: i32, %arg1: memref<1x58xf32, #tpu.memory_space<vmem>>, %arg2: memref<8x58xf32, #tpu.memory_space<vmem>>, %arg3: memref<8x58xf32, #tpu.memory_space<vmem>>, %arg4: memref<8x58xf32, #tpu.memory_space<vmem>>) attributes {dimension_semantics = [#tpu.dimension_semantics<parallel>], iteration_bounds = array<i64: 1>, scalar_prefetch = 0 : i64, scratch_operands = 0 : i64, tpu.core_type = #tpu.core_type<tc>, window_params = [{pipeline_mode = #tpu.pipeline_mode<synchronous>, transform_indices = @transform_0, window_bounds = array<i64: 1, 58>}, {transform_indices = @transform_1, window_bounds = array<i64: 8, 58>}, {transform_indices = @transform_2, window_bounds = array<i64: 8, 58>}, {transform_indices = @transform_3, window_bounds = array<i64: 8, 58>}]} {
    %c0 = arith.constant 0 : index
    %c0_0 = arith.constant 0 : index
    %0 = vector.load %arg2[%c0, %c0_0] : memref<8x58xf32, #tpu.memory_space<vmem>>, vector<8x58xf32>
    %c0_1 = arith.constant 0 : index
    %c0_2 = arith.constant 0 : index
    %1 = vector.load %arg3[%c0_1, %c0_2] : memref<8x58xf32, #tpu.memory_space<vmem>>, vector<8x58xf32>
    %2 = arith.subf %0, %1 : vector<8x58xf32>
    %3 = arith.mulf %2, %2 : vector<8x58xf32>
    %c0_3 = arith.constant 0 : index
    %c0_4 = arith.constant 0 : index
    %4 = vector.load %arg1[%c0_3, %c0_4] : memref<1x58xf32, #tpu.memory_space<vmem>>, vector<1x58xf32>
    %5 = tpu.iota {dimensions = array<i32: 0>} : vector<8x58xi32>
    %c8_i32 = arith.constant 8 : i32
    %6 = arith.muli %arg0, %c8_i32 : i32
    %c2_i32 = arith.constant 2 : i32
    %7 = arith.subi %c2_i32, %6 : i32
    %8 = vector.broadcast %7 : i32 to vector<8x58xi32>
    %9 = arith.cmpi slt, %5, %8 : vector<8x58xi32>
    %cst = arith.constant 0.000000e+00 : f32
    %10 = vector.broadcast %cst : f32 to vector<1x58xf32>
    %11 = arith.cmpf one, %4, %10 : vector<1x58xf32>
    %12 = vector.broadcast %11 : vector<1x58xi1> to vector<8x58xi1>
    %13 = arith.andi %9, %12 : vector<8x58xi1>
    %14 = vector.broadcast %4 : vector<1x58xf32> to vector<8x58xf32>
    %15 = arith.mulf %3, %14 : vector<8x58xf32>
    %cst_5 = arith.constant 0.000000e+00 : f32
    %16 = vector.broadcast %cst_5 : f32 to vector<8x58xf32>
    %17 = arith.select %13, %15, %16 : vector<8x58xi1>, vector<8x58xf32>
    %18 = vector.shape_cast %17 : vector<8x58xf32> to vector<1x8x58xf32>
    %cst_6 = arith.constant dense<0.000000e+00> : vector<8x58xf32>
    %19 = vector.multi_reduction <add>, %18, %cst_6 [0] : vector<1x8x58xf32> to vector<8x58xf32>
    %c0_7 = arith.constant 0 : index
    %c0_8 = arith.constant 0 : index
    %20 = vector.load %arg4[%c0_7, %c0_8] : memref<8x58xf32, #tpu.memory_space<vmem>>, vector<8x58xf32>
    tpu.vector_store %arg4[%c0_7, %c0_8], %19 {strides = array<i32>} : memref<8x58xf32, #tpu.memory_space<vmem>>, vector<8x58xf32>,
    return
  }
  func.func @transform_0(%arg0: i32) -> (i32, i32) {
    %c0_i32 = arith.constant 0 : i32
    %c0_i32_0 = arith.constant 0 : i32
    %c0_i32_1 = arith.constant 0 : i32
    return %c0_i32, %c0_i32_0 : i32, i32
  }
  func.func @transform_1(%arg0: i32) -> (i32, i32) {
    %c0_i32 = arith.constant 0 : i32
    %c0_i32_0 = arith.constant 0 : i32
    return %arg0, %c0_i32 : i32, i32
  }
  func.func @transform_2(%arg0: i32) -> (i32, i32) {
    %c0_i32 = arith.constant 0 : i32
    %c0_i32_0 = arith.constant 0 : i32
    return %arg0, %c0_i32 : i32, i32
  }
  func.func @transform_3(%arg0: i32) -> (i32, i32) {
    %c0_i32 = arith.constant 0 : i32
    %c0_i32_0 = arith.constant 0 : i32
    return %arg0, %c0_i32 : i32, i32
  }
}

</mosaic_0001>

<llo_original>
// kernel: tpu_custom_call.1
$region0: #{tpu_custom_call.1}
  #allocation0 [shape = 'u32[]', space=smem, size = 0x4, offset = 0x4, fixed_abs, tag = 'smem constant byte address 0x4 - core index']
  #allocation1 [shape = 'u32[144,128]{1,0:T(1,128)}', space=vmem, size = 0x12000, scoped, tag = 'internal scratch']
  %s0 = inlined_call_operand.hbm [shape: f32[1,58], index: 0, kind: input, shape index: {}]
  %s1 = inlined_call_operand.hbm [shape: f32[2,58], index: 1, kind: input, shape index: {}]
  %s2 = inlined_call_operand.vmem [shape: f32[2,58], index: 2, kind: input, shape index: {}]
  %s3 = inlined_call_operand.hbm [shape: f32[8,58], index: 3, kind: output, shape index: {}]
  %s4 = sld [smem:[#allocation0]]
  $region30: #{tpu_custom_call.1} parent=0
    _
  %s6 = ssub.s32 1, %s4
  %s7 = scalar_select 0, %s6, %s4
  $region1: #{tpu_custom_call.1} parent=0
    #allocation2 [shape = 'u8[512]{0}', space=vmem, size = 0x400, scoped, tag = 'input window, operand 0, single buffered']
    #allocation3 [shape = 's32[1]{0}', space=sflag, size = 0x4, scoped, tag = 'scoped memory for tpu_custom_call.1']
    #allocation4 [shape = 's32[1]{0}', space=sflag, size = 0x4, scoped, tag = 'scoped memory for tpu_custom_call.1']
    #allocation5 [shape = 'u8[4096]{0}', space=vmem, size = 0x1000, scoped, tag = 'input window, operand 1, single buffered']
    #allocation6 [shape = 's32[1]{0}', space=sflag, size = 0x4, scoped, tag = 'scoped memory for tpu_custom_call.1']
    #allocation7 [shape = 'u8[4096]{0}', space=vmem, size = 0x1000, scoped, tag = 'output window, operand 0, single buffered']
    %8 = vsyncpa [#allocation3], 0
    %9 = vsyncpa [#allocation6], 0
    %10 = vsyncpa [#allocation4], 0
    // Predicated region
    $region2: #{tpu_custom_call.1} parent=1 // pred_check
      _
    $region3: #{tpu_custom_call.1} parent=1 // pred_check_branch
      %12 = sbr.rel (0) target = $region5
    $region4: #{tpu_custom_call.1} parent=1 // pred_region
      %s14 = ssub.s32 16, 16
      %15 = vsyncadd [#allocation3], %s14
      %s17 = sshll.u32 [#allocation2], 4
      %s18 = int_to_ptr.vmem [resolvable:$true] %s17
      %20 = dma.hbm_to_vmem [thread:$0]  %s0, 16, %s18, [#allocation3]
    $region5: #{tpu_custom_call.1} parent=1 // pred_fallthru
      _
    // Predicated region
    $region6: #{tpu_custom_call.1} parent=1 // pred_check
      _
    $region7: #{tpu_custom_call.1} parent=1 // pred_check_branch
      %22 = sbr.rel (0) target = $region9
    $region8: #{tpu_custom_call.1} parent=1 // pred_region
      %s24 = ssub.s32 128, 32
      %25 = vsyncadd [#allocation6], %s24
      %s26 = sshll.u32 [#allocation5], 4
      %s27 = int_to_ptr.vmem [resolvable:$true] %s26
      %32 = dma.hbm_to_vmem [thread:$0]  %s1, 32, %s27, [#allocation6], 32, 32, 2
    $region9: #{tpu_custom_call.1} parent=1 // pred_fallthru
      _
    // Predicated region
    $region10: #{tpu_custom_call.1} parent=1 // pred_check
      _
    $region11: #{tpu_custom_call.1} parent=1 // pred_check_branch
      %34 = sbr.rel (0) target = $region13
    $region12: #{tpu_custom_call.1} parent=1 // pred_region
      _
    $region13: #{tpu_custom_call.1} parent=1 // pred_fallthru
      _
    // Predicated region
    $region14: #{tpu_custom_call.1} parent=1 // pred_check
      _
    $region15: #{tpu_custom_call.1} parent=1 // pred_check_branch
      %36 = sbr.rel (0) target = $region17
    $region16: #{tpu_custom_call.1} parent=1 // pred_region
      %37 = dma.done [#allocation3], 16
    $region17: #{tpu_custom_call.1} parent=1 // pred_fallthru
      _
    // Predicated region
    $region18: #{tpu_custom_call.1} parent=1 // pred_check
      _
    $region19: #{tpu_custom_call.1} parent=1 // pred_check_branch
      %39 = sbr.rel (0) target = $region21
    $region20: #{tpu_custom_call.1} parent=1 // pred_region
      %40 = dma.done [#allocation6], 128
    $region21: #{tpu_custom_call.1} parent=1 // pred_fallthru
      _
    %v41 = vld [vmem:[#allocation5] sm:$0xff]
    %v42 = vld [vmem:[%s2] sm:$0xff]
    %v43 = vsub.f32 %v41, %v42
    %v44 = vmul.f32 %v43, %v43
    %v45 = vld [vmem:[#allocation2] sm:$0x1]
    %v46 = vlaneseq
    %v47 = vshrl.u32 %v46, 7
    %s48 = smul.u32 0, 8
    %s49 = ssub.s32 2, %s48
    %v50 = vstv %s49
    %vm51 = vcmp.lt.s32.totalorder %v47, %v50
    %vm52 = vcmp.ne.f32.partialorder %v45, 0.0
    %v53 = vsel %vm52, 1, 0
    %v54 = vlaneseq
    %v55 = vshrl.u32 %v54, 7
    %v56 = vsub.s32 0, %v55
    %v57 = vrot.slane %v53, %v56
    %vm58 = vcmp.eq.s32.totalorder %v57, 1
    %vm59 = vmand %vm51, %vm58
    %v61 = vlaneseq
    %v62 = vshrl.u32 %v61, 7
    %v63 = vsub.s32 0, %v62
    %v64 = vrot.slane %v45, %v63
    %v66 = vmul.f32 %v44, %v64
    %v67 = vsel %vm59, %v66, 0.0
    %v68 = vadd.f32 %v67, 0.0
    %vm69 = vcmask 474112
    %70 = vst.msk [vmem:[#allocation7] sm:$0xff] %vm69, %v68
    // Predicated region
    $region22: #{tpu_custom_call.1} parent=1 // pred_check
      _
    $region23: #{tpu_custom_call.1} parent=1 // pred_check_branch
      %72 = sbr.rel (0) target = $region25
    $region24: #{tpu_custom_call.1} parent=1 // pred_region
      %s74 = ssub.s32 128, 128
      %75 = vsyncadd [#allocation4], %s74
      %s77 = sshll.u32 [#allocation7], 4
      %s78 = int_to_ptr.vmem [resolvable:$true] %s77
      %80 = dma.vmem_to_hbm [thread:$0]  %s78, 128, %s3, [#allocation4]
    $region25: #{tpu_custom_call.1} parent=1 // pred_fallthru
      _
    // Predicated region
    $region26: #{tpu_custom_call.1} parent=1 // pred_check
      _
    $region27: #{tpu_custom_call.1} parent=1 // pred_check_branch
      %82 = sbr.rel (0) target = $region29
    $region28: #{tpu_custom_call.1} parent=1 // pred_region
      %83 = dma.done [#allocation4], 128
    $region29: #{tpu_custom_call.1} parent=1 // pred_fallthru
      _
    %84 = vsyncpa [#allocation3], 1
    %85 = vsyncpa [#allocation6], 1
    %86 = vsyncpa [#allocation4], 1

</llo_original>
